<compile_context>
chip_gen: v5e
topology: v5e:2x2
jax: 0.10.0
libtpu: 0.0.40
codegen_flags: <defaults>
</compile_context>

<pallas_src>
import functools

import jax
import jax.numpy as jnp
from jax.experimental import pallas as pl
from jax.experimental.pallas import tpu as pltpu

HIDDEN = 256
OUT_PAD = 128          # fc3 weight padded to one full lane group (VMEM only)
TB_CAP = 1024          # max batch tile (fits every generation's scoped VMEM)


def _qnet_kernel(s_ref, a_ref, w1_ref, b1_ref, w2_ref, b2_ref, w3_ref, b3_ref,
                 o_ref, x_ref):
    ns = s_ref.shape[1]
    # In-kernel concat([state, action]) into a VMEM scratch -> single fc1
    # matmul, no wrapper-side concat/cast HBM pass.
    x_ref[:, :ns] = s_ref[...]
    x_ref[:, ns:] = a_ref[...]

    # fc1 + ReLU in f32 (K is tiny; keeps parity with the f32 reference).
    h1 = jnp.dot(x_ref[...], w1_ref[...], preferred_element_type=jnp.float32)
    h1 = jnp.maximum(h1 + b1_ref[...], 0.0)

    # fc2 + ReLU: bf16 MXU inputs, f32 accumulation, f32 epilogue.
    h2 = jnp.dot(h1.astype(jnp.bfloat16), w2_ref[...],
                 preferred_element_type=jnp.float32)
    h2 = jnp.maximum(h2 + b2_ref[...], 0.0)

    # fc3: w3 is zero-padded to 128 lanes (MXU-friendly); only column 0 is
    # real.  Store just that column -> (tb, 1) output block, so HBM writeback
    # is 4 B/row instead of 512 B/row.
    out = jnp.dot(h2.astype(jnp.bfloat16), w3_ref[...],
                  preferred_element_type=jnp.float32)
    o_ref[...] = (out[:, :1] + b3_ref[...]).astype(o_ref.dtype)


def _pick_tile(B, tb_cap):
    """Adaptive batch tile (multiple of 16), capped; prefer >=2 grid steps
    for large batches so v7x's 2 TensorCores both get work."""
    tb = 16 * pl.cdiv(B, 16)
    if tb > tb_cap:
        tb = tb_cap
    elif B >= 512:
        tb = 16 * pl.cdiv(pl.cdiv(B, 2), 16)
    return tb


@functools.partial(jax.jit, static_argnames=("n_state", "n_action", "tb_cap"))
def qnetwork_forward(state, action, params, *, n_state, n_action,
                     tb_cap=TB_CAP):
    # Glue: reproduce the PyTorch reshape semantics.
    s = state.reshape(-1, n_state).astype(jnp.float32)
    a = action.reshape(-1, n_action).astype(jnp.float32)
    B = s.shape[0]

    tb = _pick_tile(B, tb_cap)
    B_pad = tb * pl.cdiv(B, tb)
    if B_pad != B:                       # pad only when actually needed
        s = jnp.pad(s, ((0, B_pad - B), (0, 0)))
        a = jnp.pad(a, ((0, B_pad - B), (0, 0)))

    w1, b1, w2, b2, w3, b3 = (params["w1"], params["b1"], params["w2"],
                              params["b2"], params["w3"], params["b3"])
    w1 = w1.astype(jnp.float32)                      # (ns+na, 256), fc1 in f32
    b1 = b1.astype(jnp.float32)
    w2b = w2.astype(jnp.bfloat16)                    # (256, 256)
    b2 = b2.astype(jnp.float32)
    # Pad fc3 weight from (256, 1) to (256, 128) zero columns (VMEM only).
    w3p = jnp.zeros((HIDDEN, OUT_PAD), jnp.bfloat16).at[:, :1].set(
        w3.astype(jnp.bfloat16))
    b3 = b3.astype(jnp.float32)                      # (1, 1)

    grid = (B_pad // tb,)
    full = lambda i: (0, 0)      # weights/biases: one resident block, reused

    out = pl.pallas_call(
        _qnet_kernel,
        out_shape=jax.ShapeDtypeStruct((B_pad, 1), jnp.float32),
        grid_spec=pltpu.PrefetchScalarGridSpec(
            num_scalar_prefetch=0,
            grid=grid,
            in_specs=[
                pl.BlockSpec((tb, n_state), lambda i: (i, 0)),
                pl.BlockSpec((tb, n_action), lambda i: (i, 0)),
                pl.BlockSpec((n_state + n_action, HIDDEN), full),
                pl.BlockSpec((1, HIDDEN), full),
                pl.BlockSpec((HIDDEN, HIDDEN), full),
                pl.BlockSpec((1, HIDDEN), full),
                pl.BlockSpec((HIDDEN, OUT_PAD), full),
                pl.BlockSpec((1, 1), full),
            ],
            out_specs=pl.BlockSpec((tb, 1), lambda i: (i, 0)),
            scratch_shapes=[pltpu.VMEM((tb, n_state + n_action), jnp.float32)],
        ),
        compiler_params=pltpu.CompilerParams(
            dimension_semantics=("parallel",),
            vmem_limit_bytes=32 * 1024 * 1024),
    )(s, a, w1, b1, w2b, b2, w3p, b3)

    # Drop batch padding -> (B, 1).
    return out[:B]


def init_params(key, n_state, n_action):
    """Deterministic PyTorch-style uniform(-1/sqrt(fan_in), 1/sqrt(fan_in))."""
    def linear(key, fan_in, fan_out):
        kw, kb = jax.random.split(key)
        bound = 1.0 / jnp.sqrt(jnp.float32(fan_in))
        w = jax.random.uniform(kw, (fan_in, fan_out), jnp.float32,
                               -bound, bound)
        b = jax.random.uniform(kb, (1, fan_out), jnp.float32, -bound, bound)
        return w, b

    k1, k2, k3 = jax.random.split(key, 3)
    w1, b1 = linear(k1, n_state + n_action, HIDDEN)
    w2, b2 = linear(k2, HIDDEN, HIDDEN)
    w3, b3 = linear(k3, HIDDEN, 1)
    return dict(w1=w1, b1=b1, w2=w2, b2=b2, w3=w3, b3=b3)


def _reference(state, action, params, n_state, n_action):
    """Pure f32 reference (matches the PyTorch module)."""
    s = state.reshape(-1, n_state)
    a = action.reshape(-1, n_action)
    x = jnp.concatenate([s, a], axis=-1)
    x = jax.nn.relu(x @ params["w1"] + params["b1"])
    x = jax.nn.relu(x @ params["w2"] + params["b2"])
    return x @ params["w3"] + params["b3"]


if __name__ == "__main__":
    n_state, n_action, batch = 16, 8, 8

    key = jax.random.PRNGKey(0)
    kp, ks, ka = jax.random.split(key, 3)
    params = init_params(kp, n_state, n_action)
    state = jax.random.normal(ks, (batch, n_state), jnp.float32)
    action = jax.random.normal(ka, (batch, n_action), jnp.float32)

    out = qnetwork_forward(state, action, params,
                           n_state=n_state, n_action=n_action)
    out = jax.block_until_ready(out)

    ref = _reference(state, action, params, n_state, n_action)
    assert out.shape == (batch, 1)
    # fc2/fc3 use bf16 MXU inputs (f32 accumulation) -> loose tolerance vs the
    # pure-f32 reference.
    assert jnp.allclose(out, ref, atol=2e-2, rtol=2e-2), "mismatch vs reference"

    print("KERNEL_OK")
</pallas_src>

<mosaic_0001>
module attributes {stable_mosaic.version = 11 : i64} {
  func.func @_qnet_kernel(%arg0: i32, %arg1: memref<16x16xf32, #tpu.memory_space<vmem>>, %arg2: memref<16x8xf32, #tpu.memory_space<vmem>>, %arg3: memref<24x256xf32, #tpu.memory_space<vmem>>, %arg4: memref<1x256xf32, #tpu.memory_space<vmem>>, %arg5: memref<256x256xbf16, #tpu.memory_space<vmem>>, %arg6: memref<1x256xf32, #tpu.memory_space<vmem>>, %arg7: memref<256x128xbf16, #tpu.memory_space<vmem>>, %arg8: memref<1x1xf32, #tpu.memory_space<vmem>>, %arg9: memref<16x1xf32, #tpu.memory_space<vmem>>, %arg10: memref<16x24xf32, #tpu.memory_space<vmem>>) attributes {dimension_semantics = [#tpu.dimension_semantics<parallel>], iteration_bounds = array<i64: 1>, scalar_prefetch = 0 : i64, scratch_operands = 1 : i64, tpu.core_type = #tpu.core_type<tc>, window_params = [{transform_indices = @transform_0, window_bounds = array<i64: 16, 16>}, {transform_indices = @transform_1, window_bounds = array<i64: 16, 8>}, {pipeline_mode = #tpu.pipeline_mode<synchronous>, transform_indices = @transform_2, window_bounds = array<i64: 24, 256>}, {pipeline_mode = #tpu.pipeline_mode<synchronous>, transform_indices = @transform_3, window_bounds = array<i64: 1, 256>}, {pipeline_mode = #tpu.pipeline_mode<synchronous>, transform_indices = @transform_4, window_bounds = array<i64: 256, 256>}, {pipeline_mode = #tpu.pipeline_mode<synchronous>, transform_indices = @transform_5, window_bounds = array<i64: 1, 256>}, {pipeline_mode = #tpu.pipeline_mode<synchronous>, transform_indices = @transform_6, window_bounds = array<i64: 256, 128>}, {pipeline_mode = #tpu.pipeline_mode<synchronous>, transform_indices = @transform_7, window_bounds = array<i64: 1, 1>}, {transform_indices = @transform_8, window_bounds = array<i64: 16, 1>}]} {
    %c0 = arith.constant 0 : index
    %c0_0 = arith.constant 0 : index
    %0 = vector.load %arg1[%c0, %c0_0] : memref<16x16xf32, #tpu.memory_space<vmem>>, vector<16x16xf32>
    %c0_1 = arith.constant 0 : index
    %c0_2 = arith.constant 0 : index
    %1 = vector.load %arg10[%c0_1, %c0_2] : memref<16x24xf32, #tpu.memory_space<vmem>>, vector<16x16xf32>
    tpu.vector_store %arg10[%c0_1, %c0_2], %0 {strides = array<i32>} : memref<16x24xf32, #tpu.memory_space<vmem>>, vector<16x16xf32>,
    %c0_3 = arith.constant 0 : index
    %c0_4 = arith.constant 0 : index
    %2 = vector.load %arg2[%c0_3, %c0_4] : memref<16x8xf32, #tpu.memory_space<vmem>>, vector<16x8xf32>
    %c0_5 = arith.constant 0 : index
    %c16 = arith.constant 16 : index
    %3 = vector.load %arg10[%c0_5, %c16] : memref<16x24xf32, #tpu.memory_space<vmem>>, vector<16x8xf32>
    tpu.vector_store %arg10[%c0_5, %c16], %2 {strides = array<i32>} : memref<16x24xf32, #tpu.memory_space<vmem>>, vector<16x8xf32>,
    %c0_6 = arith.constant 0 : index
    %c0_7 = arith.constant 0 : index
    %4 = vector.load %arg10[%c0_6, %c0_7] : memref<16x24xf32, #tpu.memory_space<vmem>>, vector<16x24xf32>
    %c0_8 = arith.constant 0 : index
    %c0_9 = arith.constant 0 : index
    %5 = vector.load %arg3[%c0_8, %c0_9] : memref<24x256xf32, #tpu.memory_space<vmem>>, vector<24x256xf32>
    %cst = arith.constant dense<0.000000e+00> : vector<16x256xf32>
    %6 = tpu.matmul %4, %5, %cst {dimension_numbers = #tpu.dot_dimension_numbers<[1], [0], [0], [1], [0, 0, 1, 1], [], []>} : vector<16x24xf32>, vector<24x256xf32>, vector<16x256xf32> -> vector<16x256xf32>
    %c0_10 = arith.constant 0 : index
    %c0_11 = arith.constant 0 : index
    %7 = vector.load %arg4[%c0_10, %c0_11] : memref<1x256xf32, #tpu.memory_space<vmem>>, vector<1x256xf32>
    %8 = vector.broadcast %7 : vector<1x256xf32> to vector<16x256xf32>
    %9 = arith.addf %6, %8 : vector<16x256xf32>
    %cst_12 = arith.constant 0.000000e+00 : f32
    %10 = vector.broadcast %cst_12 : f32 to vector<16x256xf32>
    %11 = arith.maximumf %9, %10 : vector<16x256xf32>
    %12 = arith.truncf %11 : vector<16x256xf32> to vector<16x256xbf16>
    %c0_13 = arith.constant 0 : index
    %c0_14 = arith.constant 0 : index
    %13 = vector.load %arg5[%c0_13, %c0_14] : memref<256x256xbf16, #tpu.memory_space<vmem>>, vector<256x256xbf16>
    %cst_15 = arith.constant dense<0.000000e+00> : vector<16x256xf32>
    %14 = tpu.matmul %12, %13, %cst_15 {dimension_numbers = #tpu.dot_dimension_numbers<[1], [0], [0], [1], [0, 0, 1, 1], [], []>} : vector<16x256xbf16>, vector<256x256xbf16>, vector<16x256xf32> -> vector<16x256xf32>
    %c0_16 = arith.constant 0 : index
    %c0_17 = arith.constant 0 : index
    %15 = vector.load %arg6[%c0_16, %c0_17] : memref<1x256xf32, #tpu.memory_space<vmem>>, vector<1x256xf32>
    %16 = vector.broadcast %15 : vector<1x256xf32> to vector<16x256xf32>
    %17 = arith.addf %14, %16 : vector<16x256xf32>
    %cst_18 = arith.constant 0.000000e+00 : f32
    %18 = vector.broadcast %cst_18 : f32 to vector<16x256xf32>
    %19 = arith.maximumf %17, %18 : vector<16x256xf32>
    %20 = arith.truncf %19 : vector<16x256xf32> to vector<16x256xbf16>
    %c0_19 = arith.constant 0 : index
    %c0_20 = arith.constant 0 : index
    %21 = vector.load %arg7[%c0_19, %c0_20] : memref<256x128xbf16, #tpu.memory_space<vmem>>, vector<256x128xbf16>
    %cst_21 = arith.constant dense<0.000000e+00> : vector<16x128xf32>
    %22 = tpu.matmul %20, %21, %cst_21 {dimension_numbers = #tpu.dot_dimension_numbers<[1], [0], [0], [1], [0, 0, 1, 1], [], []>} : vector<16x256xbf16>, vector<256x128xbf16>, vector<16x128xf32> -> vector<16x128xf32>
    %23 = vector.extract_strided_slice %22 {offsets = [0, 0], sizes = [16, 1], strides = [1, 1]} : vector<16x128xf32> to vector<16x1xf32>
    %c0_22 = arith.constant 0 : index
    %c0_23 = arith.constant 0 : index
    %24 = vector.load %arg8[%c0_22, %c0_23] : memref<1x1xf32, #tpu.memory_space<vmem>>, vector<1x1xf32>
    %25 = vector.broadcast %24 : vector<1x1xf32> to vector<16x1xf32>
    %26 = arith.addf %23, %25 : vector<16x1xf32>
    %c0_24 = arith.constant 0 : index
    %c0_25 = arith.constant 0 : index
    %27 = vector.load %arg9[%c0_24, %c0_25] : memref<16x1xf32, #tpu.memory_space<vmem>>, vector<16x1xf32>
    tpu.vector_store %arg9[%c0_24, %c0_25], %26 {strides = array<i32>} : memref<16x1xf32, #tpu.memory_space<vmem>>, vector<16x1xf32>,
    return
  }
  func.func @transform_0(%arg0: i32) -> (i32, i32) {
    %c0_i32 = arith.constant 0 : i32
    %c0_i32_0 = arith.constant 0 : i32
    return %arg0, %c0_i32 : i32, i32
  }
  func.func @transform_1(%arg0: i32) -> (i32, i32) {
    %c0_i32 = arith.constant 0 : i32
    %c0_i32_0 = arith.constant 0 : i32
    return %arg0, %c0_i32 : i32, i32
  }
  func.func @transform_2(%arg0: i32) -> (i32, i32) {
    %c0_i32 = arith.constant 0 : i32
    %c0_i32_0 = arith.constant 0 : i32
    %c0_i32_1 = arith.constant 0 : i32
    return %c0_i32, %c0_i32_0 : i32, i32
  }
  func.func @transform_3(%arg0: i32) -> (i32, i32) {
    %c0_i32 = arith.constant 0 : i32
    %c0_i32_0 = arith.constant 0 : i32
    %c0_i32_1 = arith.constant 0 : i32
    return %c0_i32, %c0_i32_0 : i32, i32
  }
  func.func @transform_4(%arg0: i32) -> (i32, i32) {
    %c0_i32 = arith.constant 0 : i32
    %c0_i32_0 = arith.constant 0 : i32
    %c0_i32_1 = arith.constant 0 : i32
    return %c0_i32, %c0_i32_0 : i32, i32
  }
  func.func @transform_5(%arg0: i32) -> (i32, i32) {
    %c0_i32 = arith.constant 0 : i32
    %c0_i32_0 = arith.constant 0 : i32
    %c0_i32_1 = arith.constant 0 : i32
    return %c0_i32, %c0_i32_0 : i32, i32
  }
  func.func @transform_6(%arg0: i32) -> (i32, i32) {
    %c0_i32 = arith.constant 0 : i32
    %c0_i32_0 = arith.constant 0 : i32
    %c0_i32_1 = arith.constant 0 : i32
    return %c0_i32, %c0_i32_0 : i32, i32
  }
  func.func @transform_7(%arg0: i32) -> (i32, i32) {
    %c0_i32 = arith.constant 0 : i32
    %c0_i32_0 = arith.constant 0 : i32
    %c0_i32_1 = arith.constant 0 : i32
    return %c0_i32, %c0_i32_0 : i32, i32
  }
  func.func @transform_8(%arg0: i32) -> (i32, i32) {
    %c0_i32 = arith.constant 0 : i32
    %c0_i32_0 = arith.constant 0 : i32
    return %arg0, %c0_i32 : i32, i32
  }
}

</mosaic_0001>

<llo_original>
// kernel: qnetwork_forward.1
$region0: #{qnetwork_forward.1}
  #allocation0 [shape = 'u32[]', space=smem, size = 0x4, offset = 0x4, fixed_abs, tag = 'smem constant byte address 0x4 - core index']
  #allocation1 [shape = 'u32[72,128]{1,0:T(1,128)}', space=vmem, size = 0x9000, scoped, tag = 'internal scratch']
  #allocation2 [shape = 'f32[16,24]{1,0:T(8,128)}', space=vmem, size = 0x2000, scoped, tag = 'scratch operand']
  #allocation3 [shape = 'f32[1,1]{1,0:T(1,128)S(1)}', space=vmem, size = 0x200, scoped, tag = 'scoped memory for qnetwork_forward.1']
  %s0 = inlined_call_operand.vmem [shape: f32[16,16], index: 0, kind: input, shape index: {}]
  %s1 = inlined_call_operand.vmem [shape: f32[16,8], index: 1, kind: input, shape index: {}]
  %s2 = inlined_call_operand.vmem [shape: f32[24,256], index: 2, kind: input, shape index: {}]
  %s3 = inlined_call_operand.vmem [shape: f32[1,256], index: 3, kind: input, shape index: {}]
  %s4 = inlined_call_operand.vmem [shape: bf16[256,256], index: 4, kind: input, shape index: {}]
  %s5 = inlined_call_operand.vmem [shape: f32[1,256], index: 5, kind: input, shape index: {}]
  %s6 = inlined_call_operand.vmem [shape: bf16[256,128], index: 6, kind: input, shape index: {}]
  %s7 = inlined_call_operand.<no memory space> [shape: f32[1,1], index: 7, kind: input, shape index: {}]
  %s8 = inlined_call_operand.vmem [shape: f32[16,1], index: 8, kind: output, shape index: {}]
  %s9 = sld [smem:[#allocation0]]
  $region42: #{qnetwork_forward.1} parent=0
    _
  %s11 = ssub.s32 1, %s9
  %s12 = scalar_select 0, %s11, %s9
  %v13 = vstv %s7
  %14 = vst [vmem:[#allocation3] sm:$0x1] %v13
  // Predicated region
  $region2: #{qnetwork_forward.1} parent=0 // pred_check
    _
  $region3: #{qnetwork_forward.1} parent=0 // pred_check_branch
    %16 = sbr.rel (0) target = $region5
  $region4: #{qnetwork_forward.1} parent=0 // pred_region
    _
  $region5: #{qnetwork_forward.1} parent=0 // pred_fallthru
    _
  // Predicated region
  $region6: #{qnetwork_forward.1} parent=0 // pred_check
    _
  $region7: #{qnetwork_forward.1} parent=0 // pred_check_branch
    %18 = sbr.rel (0) target = $region9
  $region8: #{qnetwork_forward.1} parent=0 // pred_region
    _
  $region9: #{qnetwork_forward.1} parent=0 // pred_fallthru
    _
  // Predicated region
  $region10: #{qnetwork_forward.1} parent=0 // pred_check
    _
  $region11: #{qnetwork_forward.1} parent=0 // pred_check_branch
    %20 = sbr.rel (0) target = $region13
  $region12: #{qnetwork_forward.1} parent=0 // pred_region
    _
  $region13: #{qnetwork_forward.1} parent=0 // pred_fallthru
    _
  // Predicated region
  $region14: #{qnetwork_forward.1} parent=0 // pred_check
    _
  $region15: #{qnetwork_forward.1} parent=0 // pred_check_branch
    %22 = sbr.rel (0) target = $region17
  $region16: #{qnetwork_forward.1} parent=0 // pred_region
    _
  $region17: #{qnetwork_forward.1} parent=0 // pred_fallthru
    _
  // Predicated region
  $region18: #{qnetwork_forward.1} parent=0 // pred_check
    _
  $region19: #{qnetwork_forward.1} parent=0 // pred_check_branch
    %24 = sbr.rel (0) target = $region21
  $region20: #{qnetwork_forward.1} parent=0 // pred_region
    _
  $region21: #{qnetwork_forward.1} parent=0 // pred_fallthru
    _
  // Predicated region
  $region22: #{qnetwork_forward.1} parent=0 // pred_check
    _
  $region23: #{qnetwork_forward.1} parent=0 // pred_check_branch
    %26 = sbr.rel (0) target = $region25
  $region24: #{qnetwork_forward.1} parent=0 // pred_region
    _
  $region25: #{qnetwork_forward.1} parent=0 // pred_fallthru
    _
  // Predicated region
  $region26: #{qnetwork_forward.1} parent=0 // pred_check
    _
  $region27: #{qnetwork_forward.1} parent=0 // pred_check_branch
    %28 = sbr.rel (0) target = $region29
  $region28: #{qnetwork_forward.1} parent=0 // pred_region
    _
  $region29: #{qnetwork_forward.1} parent=0 // pred_fallthru
    _
  // Predicated region
  $region30: #{qnetwork_forward.1} parent=0 // pred_check
    _
  $region31: #{qnetwork_forward.1} parent=0 // pred_check_branch
    %30 = sbr.rel (0) target = $region33
  $region32: #{qnetwork_forward.1} parent=0 // pred_region
    _
  $region33: #{qnetwork_forward.1} parent=0 // pred_fallthru
    _
  %v31 = vld [vmem:[%s0] sm:$0xff]
  %v32 = vld [vmem:[%s0 + $0x8] sm:$0xff]
  %vm33 = vcmask 130048
  %34 = vst.msk [vmem:[#allocation2] sm:$0xff] %vm33, %v31
  %35 = vst.msk [vmem:[#allocation2 + $0x8] sm:$0xff] %vm33, %v32
  %v36 = vld [vmem:[%s1] sm:$0xff]
  %v37 = vld [vmem:[%s1 + $0x8] sm:$0xff]
  %40 = vrot.lane.b32.xlu0 %v36, 16
  %v41 = vpop.permute.xlu0 %40
  %42 = vrot.lane.b32.xlu0 %v37, 16
  %v43 = vpop.permute.xlu0 %42
  %vm46 = vcmask 195712
  %47 = vst.msk [vmem:[#allocation2] sm:$0xff] %vm46, %v41
  %48 = vst.msk [vmem:[#allocation2 + $0x8] sm:$0xff] %vm46, %v43
  %v49 = vld [vmem:[#allocation2] sm:$0xff]
  %v50 = vld [vmem:[#allocation2 + $0x8] sm:$0xff]
  %v51 = vld [vmem:[%s2] sm:$0xff]
  %v52 = vld [vmem:[%s2 + $0x8] sm:$0xff]
  %v53 = vld [vmem:[%s2 + $0x10] sm:$0xff]
  %v54 = vld [vmem:[%s2 + $0x18] sm:$0xff]
  %v55 = vld [vmem:[%s2 + $0x20] sm:$0xff]
  %v56 = vld [vmem:[%s2 + $0x28] sm:$0xff]
  %v57 = vld [vmem:[%s3] sm:$0x3]
  %v59 = vperm.slane %v57, 0
  %v60 = vperm.slane %v57, 1
  %vm63 = vcmask 195584
  %v65 = vsel %vm63, %v49, 0
  %v68 = vsel %vm63, %v50, 0
  %70 = vmatpush.msra.mxu0 0.0
  %71 = vmatpush.msra.mxu0 0.0
  %72 = vmatpush.msra.mxu0 0.0
  %73 = vmatpush.msra.mxu0 0.0
  %74 = vmatpush.msra.mxu0 0.0
  %75 = vmatpush.msra.mxu0 0.0
  %76 = vmatpush.msra.mxu0 0.0
  %77 = vmatpush.msra.mxu0 0.0
  %78 = vmatpush.msra.mxu0 0.0
  %79 = vmatpush.msra.mxu0 0.0
  %80 = vmatpush.msra.mxu0 0.0
  %81 = vmatpush.msra.mxu0 0.0
  %82 = vmatpush.msra.mxu0 0.0
  %83 = vmatpush.msra.mxu0 %v55
  %84 = vmatpush.msra.mxu0 %v53
  %85 = vmatpush.msra.mxu0 %v51
  %86 = vmatmul.f32.gmra.mxu0 %v65
  %v87 = vpop.f32.mrf.mxu0
  %v88 = vadd.f32 %v59, %v87
  %89 = vmatmul.f32.gmra.mxu0 %v68
  %v90 = vpop.f32.mrf.mxu0
  %v91 = vadd.f32 %v59, %v90
  %92 = vdwg.mxu0
  %93 = vmatpush.msra.mxu0 0.0
  %94 = vmatpush.msra.mxu0 0.0
  %95 = vmatpush.msra.mxu0 0.0
  %96 = vmatpush.msra.mxu0 0.0
  %97 = vmatpush.msra.mxu0 0.0
  %98 = vmatpush.msra.mxu0 0.0
  %99 = vmatpush.msra.mxu0 0.0
  %100 = vmatpush.msra.mxu0 0.0
  %101 = vmatpush.msra.mxu0 0.0
  %102 = vmatpush.msra.mxu0 0.0
  %103 = vmatpush.msra.mxu0 0.0
  %104 = vmatpush.msra.mxu0 0.0
  %105 = vmatpush.msra.mxu0 0.0
  %106 = vmatpush.msra.mxu0 %v56
  %107 = vmatpush.msra.mxu0 %v54
  %108 = vmatpush.msra.mxu0 %v52
  %109 = vmatmul.f32.gmra.mxu0 %v65
  %v110 = vpop.f32.mrf.mxu0
  %v111 = vadd.f32 %v60, %v110
  %112 = vmatmul.f32.gmra.mxu0 %v68
  %v113 = vpop.f32.mrf.mxu0
  %v114 = vadd.f32 %v60, %v113
  %115 = vdwg.mxu0
  %v116 = vmax.f32 %v88, 0.0
  %v117 = vmax.f32 %v111, 0.0
  %v118 = vmax.f32 %v91, 0.0
  %v119 = vmax.f32 %v114, 0.0
  %v120 = vpack.c.bf16 %v118, %v116
  %v121 = vpack.c.bf16 %v119, %v117
  %v122 = vld [vmem:[%s4] sm:$0xff]
  %v123 = vld [vmem:[%s4 + $0x8] sm:$0xff]
  %v124 = vld [vmem:[%s4 + $0x10] sm:$0xff]
  %v125 = vld [vmem:[%s4 + $0x18] sm:$0xff]
  %v126 = vld [vmem:[%s4 + $0x20] sm:$0xff]
  %v127 = vld [vmem:[%s4 + $0x28] sm:$0xff]
  %v128 = vld [vmem:[%s4 + $0x30] sm:$0xff]
  %v129 = vld [vmem:[%s4 + $0x38] sm:$0xff]
  %v130 = vld [vmem:[%s4 + $0x40] sm:$0xff]
  %v131 = vld [vmem:[%s4 + $0x48] sm:$0xff]
  %v132 = vld [vmem:[%s4 + $0x50] sm:$0xff]
  %v133 = vld [vmem:[%s4 + $0x58] sm:$0xff]
  %v134 = vld [vmem:[%s4 + $0x60] sm:$0xff]
  %v135 = vld [vmem:[%s4 + $0x68] sm:$0xff]
  %v136 = vld [vmem:[%s4 + $0x70] sm:$0xff]
  %v137 = vld [vmem:[%s4 + $0x78] sm:$0xff]
  %v138 = vld [vmem:[%s4 + $0x80] sm:$0xff]
  %v139 = vld [vmem:[%s4 + $0x88] sm:$0xff]
  %v140 = vld [vmem:[%s4 + $0x90] sm:$0xff]
  %v141 = vld [vmem:[%s4 + $0x98] sm:$0xff]
  %v142 = vld [vmem:[%s4 + $0xa0] sm:$0xff]
  %v143 = vld [vmem:[%s4 + $0xa8] sm:$0xff]
  %v144 = vld [vmem:[%s4 + $0xb0] sm:$0xff]
  %v145 = vld [vmem:[%s4 + $0xb8] sm:$0xff]
  %v146 = vld [vmem:[%s4 + $0xc0] sm:$0xff]
  %v147 = vld [vmem:[%s4 + $0xc8] sm:$0xff]
  %v148 = vld [vmem:[%s4 + $0xd0] sm:$0xff]
  %v149 = vld [vmem:[%s4 + $0xd8] sm:$0xff]
  %v150 = vld [vmem:[%s4 + $0xe0] sm:$0xff]
  %v151 = vld [vmem:[%s4 + $0xe8] sm:$0xff]
  %v152 = vld [vmem:[%s4 + $0xf0] sm:$0xff]
  %v153 = vld [vmem:[%s4 + $0xf8] sm:$0xff]
  %v154 = vld [vmem:[%s5] sm:$0x3]
  %v156 = vperm.slane %v154, 0
  %v157 = vperm.slane %v154, 1
  %v192 = vunpack.c.l.b16 %v122
  %v193 = vunpack.c.h.b16 %v122
  %v194 = vunpack.c.l.b16 %v123
  %v195 = vunpack.c.h.b16 %v123
  %v196 = vunpack.c.l.b16 %v124
  %v197 = vunpack.c.h.b16 %v124
  %v198 = vunpack.c.l.b16 %v125
  %v199 = vunpack.c.h.b16 %v125
  %v200 = vunpack.c.l.b16 %v126
  %v201 = vunpack.c.h.b16 %v126
  %v202 = vunpack.c.l.b16 %v127
  %v203 = vunpack.c.h.b16 %v127
  %v204 = vunpack.c.l.b16 %v128
  %v205 = vunpack.c.h.b16 %v128
  %v206 = vunpack.c.l.b16 %v129
  %v207 = vunpack.c.h.b16 %v129
  %v208 = vunpack.c.l.b16 %v130
  %v209 = vunpack.c.h.b16 %v130
  %v210 = vunpack.c.l.b16 %v131
  %v211 = vunpack.c.h.b16 %v131
  %v212 = vunpack.c.l.b16 %v132
  %v213 = vunpack.c.h.b16 %v132
  %v214 = vunpack.c.l.b16 %v133
  %v215 = vunpack.c.h.b16 %v133
  %v216 = vunpack.c.l.b16 %v134
  %v217 = vunpack.c.h.b16 %v134
  %v218 = vunpack.c.l.b16 %v135
  %v219 = vunpack.c.h.b16 %v135
  %v220 = vunpack.c.l.b16 %v136
  %v221 = vunpack.c.h.b16 %v136
  %v222 = vunpack.c.l.b16 %v137
  %v223 = vunpack.c.h.b16 %v137
  %v224 = vunpack.c.l.b16 %v138
  %v225 = vunpack.c.h.b16 %v138
  %v226 = vunpack.c.l.b16 %v139
  %v227 = vunpack.c.h.b16 %v139
  %v228 = vunpack.c.l.b16 %v140
  %v229 = vunpack.c.h.b16 %v140
  %v230 = vunpack.c.l.b16 %v141
  %v231 = vunpack.c.h.b16 %v141
  %v232 = vunpack.c.l.b16 %v142
  %v233 = vunpack.c.h.b16 %v142
  %v234 = vunpack.c.l.b16 %v143
  %v235 = vunpack.c.h.b16 %v143
  %v236 = vunpack.c.l.b16 %v144
  %v237 = vunpack.c.h.b16 %v144
  %v238 = vunpack.c.l.b16 %v145
  %v239 = vunpack.c.h.b16 %v145
  %v240 = vunpack.c.l.b16 %v146
  %v241 = vunpack.c.h.b16 %v146
  %v242 = vunpack.c.l.b16 %v147
  %v243 = vunpack.c.h.b16 %v147
  %v244 = vunpack.c.l.b16 %v148
  %v245 = vunpack.c.h.b16 %v148
  %v246 = vunpack.c.l.b16 %v149
  %v247 = vunpack.c.h.b16 %v149
  %v248 = vunpack.c.l.b16 %v150
  %v249 = vunpack.c.h.b16 %v150
  %v250 = vunpack.c.l.b16 %v151
  %v251 = vunpack.c.h.b16 %v151
  %v252 = vunpack.c.l.b16 %v152
  %v253 = vunpack.c.h.b16 %v152
  %v254 = vunpack.c.l.b16 %v153
  %v255 = vunpack.c.h.b16 %v153
  %v256 = vpack.c.b16 %v194, %v192
  %v257 = vpack.c.b16 %v195, %v193
  %v258 = vpack.c.b16 %v198, %v196
  %v259 = vpack.c.b16 %v199, %v197
  %v260 = vpack.c.b16 %v202, %v200
  %v261 = vpack.c.b16 %v203, %v201
  %v262 = vpack.c.b16 %v206, %v204
  %v263 = vpack.c.b16 %v207, %v205
  %v264 = vpack.c.b16 %v210, %v208
  %v265 = vpack.c.b16 %v211, %v209
  %v266 = vpack.c.b16 %v214, %v212
  %v267 = vpack.c.b16 %v215, %v213
  %v268 = vpack.c.b16 %v218, %v216
  %v269 = vpack.c.b16 %v219, %v217
  %v270 = vpack.c.b16 %v222, %v220
  %v271 = vpack.c.b16 %v223, %v221
  %v272 = vpack.c.b16 %v226, %v224
  %v273 = vpack.c.b16 %v227, %v225
  %v274 = vpack.c.b16 %v230, %v228
  %v275 = vpack.c.b16 %v231, %v229
  %v276 = vpack.c.b16 %v234, %v232
  %v277 = vpack.c.b16 %v235, %v233
  %v278 = vpack.c.b16 %v238, %v236
  %v279 = vpack.c.b16 %v239, %v237
  %v280 = vpack.c.b16 %v242, %v240
  %v281 = vpack.c.b16 %v243, %v241
  %v282 = vpack.c.b16 %v246, %v244
  %v283 = vpack.c.b16 %v247, %v245
  %v284 = vpack.c.b16 %v250, %v248
  %v285 = vpack.c.b16 %v251, %v249
  %v286 = vpack.c.b16 %v254, %v252
  %v287 = vpack.c.b16 %v255, %v253
  %320 = vmatpush.bf16.msra.mxu0 %v270
  %321 = vmatpush.bf16.msra.mxu0 %v268
  %322 = vmatpush.bf16.msra.mxu0 %v266
  %323 = vmatpush.bf16.msra.mxu0 %v264
  %324 = vmatpush.bf16.msra.mxu0 %v262
  %325 = vmatpush.bf16.msra.mxu0 %v260
  %326 = vmatpush.bf16.msra.mxu0 %v258
  %327 = vmatpush.bf16.msra.mxu0 %v256
  %328 = vmatmul.bf16.gmra.mxu0 %v120
  %v329 = vpop.f32.mrf.mxu0
  %v330 = vadd.f32 %v156, %v329
  %v331 = vpop.f32.mrf.mxu0
  %v332 = vadd.f32 %v156, %v331
  %333 = vdwg.mxu0
  %334 = vmatpush.bf16.msra.mxu0 %v286
  %335 = vmatpush.bf16.msra.mxu0 %v284
  %336 = vmatpush.bf16.msra.mxu0 %v282
  %337 = vmatpush.bf16.msra.mxu0 %v280
  %338 = vmatpush.bf16.msra.mxu0 %v278
  %339 = vmatpush.bf16.msra.mxu0 %v276
  %340 = vmatpush.bf16.msra.mxu0 %v274
  %341 = vmatpush.bf16.msra.mxu0 %v272
  %342 = vmatmul.bf16.gmra.mxu0 %v121
  %v343 = vpop.f32.mrf.mxu0
  %v344 = vadd.f32 %v330, %v343
  %v345 = vpop.f32.mrf.mxu0
  %v346 = vadd.f32 %v332, %v345
  %347 = vdwg.mxu0
  %348 = vmatpush.bf16.msra.mxu0 %v271
  %349 = vmatpush.bf16.msra.mxu0 %v269
  %350 = vmatpush.bf16.msra.mxu0 %v267
  %351 = vmatpush.bf16.msra.mxu0 %v265
  %352 = vmatpush.bf16.msra.mxu0 %v263
  %353 = vmatpush.bf16.msra.mxu0 %v261
  %354 = vmatpush.bf16.msra.mxu0 %v259
  %355 = vmatpush.bf16.msra.mxu0 %v257
  %356 = vmatmul.bf16.gmra.mxu0 %v120
  %v357 = vpop.f32.mrf.mxu0
  %v358 = vadd.f32 %v157, %v357
  %v359 = vpop.f32.mrf.mxu0
  %v360 = vadd.f32 %v157, %v359
  %361 = vdwg.mxu0
  %362 = vmatpush.bf16.msra.mxu0 %v287
  %363 = vmatpush.bf16.msra.mxu0 %v285
  %364 = vmatpush.bf16.msra.mxu0 %v283
  %365 = vmatpush.bf16.msra.mxu0 %v281
  %366 = vmatpush.bf16.msra.mxu0 %v279
  %367 = vmatpush.bf16.msra.mxu0 %v277
  %368 = vmatpush.bf16.msra.mxu0 %v275
  %369 = vmatpush.bf16.msra.mxu0 %v273
  %370 = vmatmul.bf16.gmra.mxu0 %v121
  %v371 = vpop.f32.mrf.mxu0
  %v372 = vadd.f32 %v358, %v371
  %v373 = vpop.f32.mrf.mxu0
  %v374 = vadd.f32 %v360, %v373
  %375 = vdwg.mxu0
  %v376 = vmax.f32 %v344, 0.0
  %v377 = vmax.f32 %v372, 0.0
  %v378 = vmax.f32 %v346, 0.0
  %v379 = vmax.f32 %v374, 0.0
  %v380 = vpack.c.bf16 %v378, %v376
  %v381 = vpack.c.bf16 %v379, %v377
  %v382 = vld [vmem:[%s6] sm:$0xf]
  %v383 = vld [vmem:[%s6 + $0x4] sm:$0xf]
  %v384 = vld [vmem:[%s6 + $0x8] sm:$0xf]
  %v385 = vld [vmem:[%s6 + $0xc] sm:$0xf]
  %v386 = vld [vmem:[%s6 + $0x10] sm:$0xf]
  %v387 = vld [vmem:[%s6 + $0x14] sm:$0xf]
  %v388 = vld [vmem:[%s6 + $0x18] sm:$0xf]
  %v389 = vld [vmem:[%s6 + $0x1c] sm:$0xf]
  %v390 = vld [vmem:[%s6 + $0x20] sm:$0xf]
  %v391 = vld [vmem:[%s6 + $0x24] sm:$0xf]
  %v392 = vld [vmem:[%s6 + $0x28] sm:$0xf]
  %v393 = vld [vmem:[%s6 + $0x2c] sm:$0xf]
  %v394 = vld [vmem:[%s6 + $0x30] sm:$0xf]
  %v395 = vld [vmem:[%s6 + $0x34] sm:$0xf]
  %v396 = vld [vmem:[%s6 + $0x38] sm:$0xf]
  %v397 = vld [vmem:[%s6 + $0x3c] sm:$0xf]
  %v398 = vld [vmem:[%s6 + $0x40] sm:$0xf]
  %v399 = vld [vmem:[%s6 + $0x44] sm:$0xf]
  %v400 = vld [vmem:[%s6 + $0x48] sm:$0xf]
  %v401 = vld [vmem:[%s6 + $0x4c] sm:$0xf]
  %v402 = vld [vmem:[%s6 + $0x50] sm:$0xf]
  %v403 = vld [vmem:[%s6 + $0x54] sm:$0xf]
  %v404 = vld [vmem:[%s6 + $0x58] sm:$0xf]
  %v405 = vld [vmem:[%s6 + $0x5c] sm:$0xf]
  %v406 = vld [vmem:[%s6 + $0x60] sm:$0xf]
  %v407 = vld [vmem:[%s6 + $0x64] sm:$0xf]
  %v408 = vld [vmem:[%s6 + $0x68] sm:$0xf]
  %v409 = vld [vmem:[%s6 + $0x6c] sm:$0xf]
  %v410 = vld [vmem:[%s6 + $0x70] sm:$0xf]
  %v411 = vld [vmem:[%s6 + $0x74] sm:$0xf]
  %v412 = vld [vmem:[%s6 + $0x78] sm:$0xf]
  %v413 = vld [vmem:[%s6 + $0x7c] sm:$0xf]
  %v446 = vunpack.c.l.b16 %v382
  %v447 = vunpack.c.l.b16 %v383
  %v448 = vunpack.c.l.b16 %v384
  %v449 = vunpack.c.l.b16 %v385
  %v450 = vunpack.c.l.b16 %v386
  %v451 = vunpack.c.l.b16 %v387
  %v452 = vunpack.c.l.b16 %v388
  %v453 = vunpack.c.l.b16 %v389
  %v454 = vunpack.c.l.b16 %v390
  %v455 = vunpack.c.l.b16 %v391
  %v456 = vunpack.c.l.b16 %v392
  %v457 = vunpack.c.l.b16 %v393
  %v458 = vunpack.c.l.b16 %v394
  %v459 = vunpack.c.l.b16 %v395
  %v460 = vunpack.c.l.b16 %v396
  %v461 = vunpack.c.l.b16 %v397
  %v462 = vunpack.c.l.b16 %v398
  %v463 = vunpack.c.l.b16 %v399
  %v464 = vunpack.c.l.b16 %v400
  %v465 = vunpack.c.l.b16 %v401
  %v466 = vunpack.c.l.b16 %v402
  %v467 = vunpack.c.l.b16 %v403
  %v468 = vunpack.c.l.b16 %v404
  %v469 = vunpack.c.l.b16 %v405
  %v470 = vunpack.c.l.b16 %v406
  %v471 = vunpack.c.l.b16 %v407
  %v472 = vunpack.c.l.b16 %v408
  %v473 = vunpack.c.l.b16 %v409
  %v474 = vunpack.c.l.b16 %v410
  %v475 = vunpack.c.l.b16 %v411
  %v476 = vunpack.c.l.b16 %v412
  %v477 = vunpack.c.l.b16 %v413
  %v478 = vpack.c.b16 %v447, %v446
  %v479 = vpack.c.b16 %v449, %v448
  %v480 = vpack.c.b16 %v451, %v450
  %v481 = vpack.c.b16 %v453, %v452
  %v482 = vpack.c.b16 %v455, %v454
  %v483 = vpack.c.b16 %v457, %v456
  %v484 = vpack.c.b16 %v459, %v458
  %v485 = vpack.c.b16 %v461, %v460
  %v486 = vpack.c.b16 %v463, %v462
  %v487 = vpack.c.b16 %v465, %v464
  %v488 = vpack.c.b16 %v467, %v466
  %v489 = vpack.c.b16 %v469, %v468
  %v490 = vpack.c.b16 %v471, %v470
  %v491 = vpack.c.b16 %v473, %v472
  %v492 = vpack.c.b16 %v475, %v474
  %v493 = vpack.c.b16 %v477, %v476
  %510 = vmatpush.bf16.msra.mxu0 %v485
  %511 = vmatpush.bf16.msra.mxu0 %v484
  %512 = vmatpush.bf16.msra.mxu0 %v483
  %513 = vmatpush.bf16.msra.mxu0 %v482
  %514 = vmatpush.bf16.msra.mxu0 %v481
  %515 = vmatpush.bf16.msra.mxu0 %v480
  %516 = vmatpush.bf16.msra.mxu0 %v479
  %517 = vmatpush.bf16.msra.mxu0 %v478
  %518 = vmatmul.bf16.gmra.mxu0 %v380
  %v519 = vpop.f32.mrf.mxu0
  %v520 = vadd.f32 0.0, %v519
  %v521 = vpop.f32.mrf.mxu0
  %v522 = vadd.f32 0.0, %v521
  %523 = vdwg.mxu0
  %524 = vmatpush.bf16.msra.mxu0 %v493
  %525 = vmatpush.bf16.msra.mxu0 %v492
  %526 = vmatpush.bf16.msra.mxu0 %v491
  %527 = vmatpush.bf16.msra.mxu0 %v490
  %528 = vmatpush.bf16.msra.mxu0 %v489
  %529 = vmatpush.bf16.msra.mxu0 %v488
  %530 = vmatpush.bf16.msra.mxu0 %v487
  %531 = vmatpush.bf16.msra.mxu0 %v486
  %532 = vmatmul.bf16.gmra.mxu0 %v381
  %v533 = vpop.f32.mrf.mxu0
  %v534 = vadd.f32 %v520, %v533
  %v535 = vpop.f32.mrf.mxu0
  %v536 = vadd.f32 %v522, %v535
  %537 = vdwg.mxu0
  %v538 = vld [vmem:[#allocation3] sm:$0x1]
  %v540 = vperm.slane %v538, 0
  %v542 = vadd.f32 %v534, %v540
  %v543 = vadd.f32 %v536, %v540
  %vm544 = vcmask 7168
  %545 = vst.msk [vmem:[%s8] sm:$0xff] %vm544, %v542
  %546 = vst.msk [vmem:[%s8 + $0x8] sm:$0xff] %vm544, %v543
  // Predicated region
  $region34: #{qnetwork_forward.1} parent=0 // pred_check
    _
  $region35: #{qnetwork_forward.1} parent=0 // pred_check_branch
    %548 = sbr.rel (0) target = $region37
  $region36: #{qnetwork_forward.1} parent=0 // pred_region
    _
  $region37: #{qnetwork_forward.1} parent=0 // pred_fallthru
    _
  // Predicated region
  $region38: #{qnetwork_forward.1} parent=0 // pred_check
    _
  $region39: #{qnetwork_forward.1} parent=0 // pred_check_branch
    %550 = sbr.rel (0) target = $region41
  $region40: #{qnetwork_forward.1} parent=0 // pred_region
    _
  $region41: #{qnetwork_forward.1} parent=0 // pred_fallthru
    _

</llo_original>
